<compile_context>
chip_gen: v7x
topology: tpu7x:2x2x1
jax: 0.10.0
libtpu: 0.0.40
codegen_flags: <defaults>
</compile_context>

<pallas_src>
import jax
import jax.numpy as jnp
import numpy as np
from jax.experimental import pallas as pl
from jax.experimental.pallas import tpu as pltpu

FILTER_NUM = 20
WINDOW_SIZES = (1, 2, 3, 4)
KMAX = max(WINDOW_SIZES)
DPAD = 128          # padded lane width for conv-features / hidden / event logits
NEG_INF = -1e30     # bias for padded softmax columns


def _round_up(x, m):
    return -(-x // m) * m


def eann_kernel(slab_ref, valid_ref, wconv_ref, wdense_ref, ball_ref, det_ref, disc_ref):
    # slab_ref : (L_pad, TB, C) bf16   t-major im2row slab (already multiplied by the 1/len mask)
    # valid_ref: (L_pad, DPAD) f32     static (position, column-group) validity for the max-pool
    # wconv_ref: (C, DPAD) bf16        four convs stacked along the lane axis (zero-padded)
    # wdense_ref: (3, DPAD, DPAD) bf16 [fc_cnn | d1 | d2] zero-padded
    # ball_ref : (4, DPAD) f32         [conv_b | fc_b | d1_b | d2_b (pad = -1e30)]
    L, TB, C = slab_ref.shape
    DP = det_ref.shape[-1]

    # --- all four convs as ONE MXU matmul (contraction = KMAX*E = 128) ---
    slab = slab_ref[...].reshape(L * TB, C)
    conv = jnp.dot(slab, wconv_ref[...], preferred_element_type=jnp.float32)
    conv = conv.reshape(L, TB, DP) + ball_ref[0:1, :]      # + conv biases
    conv = jnp.maximum(conv, 0.0)                          # F.relu(conv(...))

    # max_pool1d over valid positions only: zero invalid tails (safe: relu >= 0), then a
    # leading-axis max (pure VPU, no XLU relayout).
    conv = conv * valid_ref[...][:, None, :]
    feat = jnp.max(conv, axis=0)                           # torch.cat of pooled maxima -> (TB, DP)

    # --- fc_cnn + relu (detector output) ---
    det = jnp.dot(feat.astype(jnp.bfloat16), wdense_ref[0],
                  preferred_element_type=jnp.float32) + ball_ref[1:2, :]
    det = jnp.maximum(det, 0.0)
    det_ref[...] = det

    # --- event discriminator ---
    # grad_reverse (GRL) is the identity in the forward pass.
    # nn.LeakyReLU(True): negative_slope = float(True) = 1.0 -> identity (elided).
    h = jnp.dot(det.astype(jnp.bfloat16), wdense_ref[1],
                preferred_element_type=jnp.float32) + ball_ref[2:3, :]
    logits = jnp.dot(h.astype(jnp.bfloat16), wdense_ref[2],
                     preferred_element_type=jnp.float32) + ball_ref[3:4, :]
    m = jnp.max(logits, axis=1, keepdims=True)             # Softmax(dim=1); padded cols at -1e30
    e = jnp.exp(logits - m)
    disc_ref[...] = e * pl.reciprocal(jnp.sum(e, axis=1, keepdims=True), approx=True)


def pack_params(params, E, H, EV):
    """Pack conv / fc / discriminator weights into 3 lane-dense, zero-padded arrays."""
    F = FILTER_NUM
    wconv = np.zeros((KMAX * E, DPAD), np.float32)
    ball = np.zeros((4, DPAD), np.float32)
    for g, K in enumerate(WINDOW_SIZES):
        w = np.asarray(params[f"conv_w{K}"])               # (K, E, F)
        for k in range(K):
            wconv[k * E:(k + 1) * E, g * F:(g + 1) * F] = w[k]
        ball[0, g * F:(g + 1) * F] = np.asarray(params[f"conv_b{K}"]).reshape(-1)
    wdense = np.zeros((3, DPAD, DPAD), np.float32)
    wdense[0, :F * len(WINDOW_SIZES), :H] = np.asarray(params["fc_w"])
    wdense[1, :H, :H] = np.asarray(params["d1_w"])
    wdense[2, :H, :EV] = np.asarray(params["d2_w"])
    ball[1, :H] = np.asarray(params["fc_b"]).reshape(-1)
    ball[2, :H] = np.asarray(params["d1_b"]).reshape(-1)
    ball[3, :] = NEG_INF                                    # padded event logits -> exp == 0
    ball[3, :EV] = np.asarray(params["d2_b"]).reshape(-1)
    return (jnp.asarray(wconv, jnp.bfloat16),
            jnp.asarray(wdense, jnp.bfloat16),
            jnp.asarray(ball, jnp.float32))


def eann_forward(input_ids, mask, params, tb=256):
    emb = params["embedding"]                               # (V, E)
    # Embedding lookup + "sentence *= masks" (XLA glue).
    sent = jnp.take(emb, input_ids, axis=0).astype(jnp.float32) * mask.astype(jnp.float32)
    B, L, E = sent.shape
    H = params["fc_b"].shape[-1]
    EV = params["d2_b"].shape[-1]
    C = KMAX * E                                            # contraction width (= 128 for E = 32)

    wconv, wdense, ball = pack_params(params, E, H, EV)

    # Batch tile: multiple of 8, default up to 256 rows.  Keep >= 2 grid steps whenever the
    # batch allows it so the 'parallel' grid axis can be sharded across both v7x TensorCores.
    B8 = _round_up(B, 8)
    TB = min(tb, B8)
    if B8 >= 16:
        TB = min(TB, _round_up(B8 // 2, 8))
    B_pad = _round_up(B, TB)
    L_pad = _round_up(L, 8)

    # --- wrapper-side im2row: lane-dense bf16 slab, t-major (L_pad, B_pad, C) ---
    # slab[b, t, k*E:(k+1)*E] = sent[b, t+k, :] (zero past the sentence end / padded rows).
    sent_ext = jnp.pad(sent, ((0, 0), (0, KMAX - 1), (0, 0)))
    slab = jnp.concatenate([sent_ext[:, k:k + L, :] for k in range(KMAX)], axis=-1)  # (B, L, C)
    slab_p = jnp.zeros((B_pad, L_pad, C), jnp.float32).at[:B, :L, :].set(slab)
    slab_t = jnp.transpose(slab_p, (1, 0, 2)).astype(jnp.bfloat16)                   # (L_pad, B_pad, C)

    # --- static max-pool validity mask (hoisted out of the kernel) ---
    t_idx = np.arange(L_pad)[:, None]
    grp = np.minimum(np.arange(DPAD)[None, :] // FILTER_NUM, KMAX - 1)  # column group -> K = grp+1
    valid = jnp.asarray((t_idx < (L - grp)).astype(np.float32))         # (L_pad, DPAD)

    flops = 2 * B_pad * L_pad * C * DPAD + 3 * 2 * B_pad * DPAD * DPAD
    bytes_accessed = (slab_t.size * 2 + valid.size * 4 + wconv.size * 2
                      + wdense.size * 2 + ball.size * 4 + 2 * B_pad * DPAD * 4)
    cost = pl.CostEstimate(flops=flops, transcendentals=B_pad * DPAD,
                           bytes_accessed=bytes_accessed)

    det_p, disc_p = pl.pallas_call(
        eann_kernel,
        grid=(B_pad // TB,),
        in_specs=[
            pl.BlockSpec((L_pad, TB, C), lambda b: (0, b, 0)),   # streamed slab tile
            pl.BlockSpec((L_pad, DPAD), lambda b: (0, 0)),       # resident validity mask
            pl.BlockSpec(wconv.shape, lambda b: (0, 0)),         # stacked conv weight (resident)
            pl.BlockSpec(wdense.shape, lambda b: (0, 0, 0)),     # packed fc/d1/d2 weights
            pl.BlockSpec(ball.shape, lambda b: (0, 0)),          # packed biases
        ],
        out_specs=(pl.BlockSpec((TB, DPAD), lambda b: (b, 0)),
                   pl.BlockSpec((TB, DPAD), lambda b: (b, 0))),
        out_shape=(jax.ShapeDtypeStruct((B_pad, DPAD), jnp.float32),
                   jax.ShapeDtypeStruct((B_pad, DPAD), jnp.float32)),
        compiler_params=pltpu.CompilerParams(
            dimension_semantics=("parallel",),
            vmem_limit_bytes=64 * 1024 * 1024),   # headroom for larger tb / long sequences
        cost_estimate=cost,
    )(slab_t, valid, wconv, wdense, ball)

    return det_p[:B, :H], disc_p[:B, :EV]


def init_params(key, vocab, E, H, EV):
    keys = jax.random.split(key, 16)
    F = FILTER_NUM
    p = {}
    p["embedding"] = jax.random.normal(keys[0], (vocab, E), jnp.float32) * 0.1
    for i, K in enumerate(WINDOW_SIZES):
        # PyTorch Conv2d weight: (F, 1, K, E) -> stored as (K, E, F)
        w = jax.random.normal(keys[1 + i], (F, 1, K, E), jnp.float32) * 0.1
        p[f"conv_w{K}"] = jnp.transpose(w[:, 0, :, :], (1, 2, 0))
        p[f"conv_b{K}"] = (jax.random.normal(keys[5 + i], (F,), jnp.float32) * 0.1).reshape(1, F)
    # fc_cnn: (H, 4F) -> stored (4F, H)
    p["fc_w"] = jnp.transpose(jax.random.normal(keys[9], (H, F * len(WINDOW_SIZES)), jnp.float32) * 0.1)
    p["fc_b"] = (jax.random.normal(keys[10], (H,), jnp.float32) * 0.1).reshape(1, H)
    # event_discriminator: Linear(H,H), LeakyReLU(True), Linear(H,EV), Softmax(dim=1)
    p["d1_w"] = jnp.transpose(jax.random.normal(keys[11], (H, H), jnp.float32) * 0.1)
    p["d1_b"] = (jax.random.normal(keys[12], (H,), jnp.float32) * 0.1).reshape(1, H)
    p["d2_w"] = jnp.transpose(jax.random.normal(keys[13], (EV, H), jnp.float32) * 0.1)
    p["d2_b"] = (jax.random.normal(keys[14], (EV,), jnp.float32) * 0.1).reshape(1, EV)
    return p


def eann_reference(input_ids, mask, params):
    """Pure-JAX f32 reference of the same forward pass (for a sanity check)."""
    sent = jnp.take(params["embedding"], input_ids, axis=0) * mask     # (B,L,E)*(B,L,1)
    L = sent.shape[1]
    pooled = []
    for K in WINDOW_SIZES:
        w = params[f"conv_w{K}"]
        b = params[f"conv_b{K}"]
        l_out = L - K + 1
        acc = sum(jnp.einsum("ble,ef->blf", sent[:, k:k + l_out, :], w[k]) for k in range(K))
        acc = jax.nn.relu(acc + b[None])
        pooled.append(jnp.max(acc, axis=1))
    feat = jnp.concatenate(pooled, axis=1)
    det = jax.nn.relu(feat @ params["fc_w"] + params["fc_b"])
    h = det @ params["d1_w"] + params["d1_b"]          # LeakyReLU(negative_slope=1.0) == identity
    logits = h @ params["d2_w"] + params["d2_b"]
    return det, jax.nn.softmax(logits, axis=1)


if __name__ == "__main__":
    B, L, E, V = 8, 16, 32, 50         # batch, max_sequence_length, embedding dim, vocab
    H, EV = 32, 4                      # eann_hidden_dim, eann_event_num

    key = jax.random.PRNGKey(0)
    kp, ki = jax.random.split(key)
    params = init_params(kp, V, E, H, EV)

    # Build (input_ids, mask) like TextCNN._encode: pad ids with 0, mask[:len] = 1/len.
    lengths = [5, 7, 9, 12, 3, 15, 8, 11]
    ids_np = np.array(jax.random.randint(ki, (B, L), 1, V), dtype=np.int32)
    mask_np = np.zeros((B, L, 1), np.float32)
    for i, ln in enumerate(lengths):
        ids_np[i, ln:] = 0
        mask_np[i, :ln, 0] = 1.0 / ln
    input_ids = jnp.asarray(ids_np)
    mask = jnp.asarray(mask_np)

    det, disc = eann_forward(input_ids, mask, params)
    jax.block_until_ready((det, disc))

    det_ref, disc_ref = eann_reference(input_ids, mask, params)
    # bf16 MXU operands (f32 accumulation) + approx reciprocal -> slightly looser tolerance.
    np.testing.assert_allclose(np.asarray(det), np.asarray(det_ref), rtol=2e-2, atol=2e-2)
    np.testing.assert_allclose(np.asarray(disc), np.asarray(disc_ref), rtol=2e-2, atol=2e-2)

    print("KERNEL_OK")
</pallas_src>

<mosaic_0001>
module attributes {stable_mosaic.version = 11 : i64} {
  func.func @eann_kernel(%arg0: i32, %arg1: memref<16x8x128xbf16, #tpu.memory_space<vmem>>, %arg2: memref<16x128xf32, #tpu.memory_space<vmem>>, %arg3: memref<128x128xbf16, #tpu.memory_space<vmem>>, %arg4: memref<3x128x128xbf16, #tpu.memory_space<vmem>>, %arg5: memref<4x128xf32, #tpu.memory_space<vmem>>, %arg6: memref<8x128xf32, #tpu.memory_space<vmem>>, %arg7: memref<8x128xf32, #tpu.memory_space<vmem>>) attributes {dimension_semantics = [#tpu.dimension_semantics<parallel>], iteration_bounds = array<i64: 1>, scalar_prefetch = 0 : i64, scratch_operands = 0 : i64, tpu.core_type = #tpu.core_type<tc>, window_params = [{transform_indices = @transform_0, window_bounds = array<i64: 16, 8, 128>}, {pipeline_mode = #tpu.pipeline_mode<synchronous>, transform_indices = @transform_1, window_bounds = array<i64: 16, 128>}, {pipeline_mode = #tpu.pipeline_mode<synchronous>, transform_indices = @transform_2, window_bounds = array<i64: 128, 128>}, {pipeline_mode = #tpu.pipeline_mode<synchronous>, transform_indices = @transform_3, window_bounds = array<i64: 3, 128, 128>}, {pipeline_mode = #tpu.pipeline_mode<synchronous>, transform_indices = @transform_4, window_bounds = array<i64: 4, 128>}, {transform_indices = @transform_5, window_bounds = array<i64: 8, 128>}, {transform_indices = @transform_6, window_bounds = array<i64: 8, 128>}]} {
    %c0 = arith.constant 0 : index
    %c0_0 = arith.constant 0 : index
    %c0_1 = arith.constant 0 : index
    %0 = vector.load %arg1[%c0, %c0_0, %c0_1] : memref<16x8x128xbf16, #tpu.memory_space<vmem>>, vector<16x8x128xbf16>
    %1 = vector.shape_cast %0 : vector<16x8x128xbf16> to vector<128x128xbf16>
    %c0_2 = arith.constant 0 : index
    %c0_3 = arith.constant 0 : index
    %2 = vector.load %arg3[%c0_2, %c0_3] : memref<128x128xbf16, #tpu.memory_space<vmem>>, vector<128x128xbf16>
    %cst = arith.constant dense<0.000000e+00> : vector<128x128xf32>
    %3 = tpu.matmul %1, %2, %cst {dimension_numbers = #tpu.dot_dimension_numbers<[1], [0], [0], [1], [0, 0, 1, 1], [], []>} : vector<128x128xbf16>, vector<128x128xbf16>, vector<128x128xf32> -> vector<128x128xf32>
    %4 = vector.shape_cast %3 : vector<128x128xf32> to vector<16x8x128xf32>
    %c0_4 = arith.constant 0 : index
    %c0_5 = arith.constant 0 : index
    %5 = vector.load %arg5[%c0_4, %c0_5] : memref<4x128xf32, #tpu.memory_space<vmem>>, vector<1x128xf32>
    %6 = vector.shape_cast %5 : vector<1x128xf32> to vector<1x1x128xf32>
    %7 = vector.broadcast %6 : vector<1x1x128xf32> to vector<16x8x128xf32>
    %8 = arith.addf %4, %7 : vector<16x8x128xf32>
    %cst_6 = arith.constant 0.000000e+00 : f32
    %9 = vector.broadcast %cst_6 : f32 to vector<16x8x128xf32>
    %10 = arith.maximumf %8, %9 : vector<16x8x128xf32>
    %c0_7 = arith.constant 0 : index
    %c0_8 = arith.constant 0 : index
    %11 = vector.load %arg2[%c0_7, %c0_8] : memref<16x128xf32, #tpu.memory_space<vmem>>, vector<16x128xf32>
    %12 = vector.shape_cast %11 : vector<16x128xf32> to vector<16x1x128xf32>
    %13 = vector.broadcast %12 : vector<16x1x128xf32> to vector<16x8x128xf32>
    %14 = arith.mulf %10, %13 : vector<16x8x128xf32>
    %cst_9 = arith.constant dense<0xFF800000> : vector<8x128xf32>
    %15 = vector.multi_reduction <maximumf>, %14, %cst_9 [0] : vector<16x8x128xf32> to vector<8x128xf32>
    %16 = arith.truncf %15 : vector<8x128xf32> to vector<8x128xbf16>
    %c0_10 = arith.constant 0 : index
    %c0_11 = arith.constant 0 : index
    %c0_12 = arith.constant 0 : index
    %17 = vector.load %arg4[%c0_10, %c0_11, %c0_12] : memref<3x128x128xbf16, #tpu.memory_space<vmem>>, vector<1x128x128xbf16>
    %18 = vector.shape_cast %17 : vector<1x128x128xbf16> to vector<128x128xbf16>
    %cst_13 = arith.constant dense<0.000000e+00> : vector<8x128xf32>
    %19 = tpu.matmul %16, %18, %cst_13 {dimension_numbers = #tpu.dot_dimension_numbers<[1], [0], [0], [1], [0, 0, 1, 1], [], []>} : vector<8x128xbf16>, vector<128x128xbf16>, vector<8x128xf32> -> vector<8x128xf32>
    %c1 = arith.constant 1 : index
    %c0_14 = arith.constant 0 : index
    %20 = vector.load %arg5[%c1, %c0_14] : memref<4x128xf32, #tpu.memory_space<vmem>>, vector<1x128xf32>
    %21 = vector.broadcast %20 : vector<1x128xf32> to vector<8x128xf32>
    %22 = arith.addf %19, %21 : vector<8x128xf32>
    %cst_15 = arith.constant 0.000000e+00 : f32
    %23 = vector.broadcast %cst_15 : f32 to vector<8x128xf32>
    %24 = arith.maximumf %22, %23 : vector<8x128xf32>
    %c0_16 = arith.constant 0 : index
    %c0_17 = arith.constant 0 : index
    %25 = vector.load %arg6[%c0_16, %c0_17] : memref<8x128xf32, #tpu.memory_space<vmem>>, vector<8x128xf32>
    tpu.vector_store %arg6[%c0_16, %c0_17], %24 {strides = array<i32>} : memref<8x128xf32, #tpu.memory_space<vmem>>, vector<8x128xf32>,
    %26 = arith.truncf %24 : vector<8x128xf32> to vector<8x128xbf16>
    %c1_18 = arith.constant 1 : index
    %c0_19 = arith.constant 0 : index
    %c0_20 = arith.constant 0 : index
    %27 = vector.load %arg4[%c1_18, %c0_19, %c0_20] : memref<3x128x128xbf16, #tpu.memory_space<vmem>>, vector<1x128x128xbf16>
    %28 = vector.shape_cast %27 : vector<1x128x128xbf16> to vector<128x128xbf16>
    %cst_21 = arith.constant dense<0.000000e+00> : vector<8x128xf32>
    %29 = tpu.matmul %26, %28, %cst_21 {dimension_numbers = #tpu.dot_dimension_numbers<[1], [0], [0], [1], [0, 0, 1, 1], [], []>} : vector<8x128xbf16>, vector<128x128xbf16>, vector<8x128xf32> -> vector<8x128xf32>
    %c2 = arith.constant 2 : index
    %c0_22 = arith.constant 0 : index
    %30 = vector.load %arg5[%c2, %c0_22] : memref<4x128xf32, #tpu.memory_space<vmem>>, vector<1x128xf32>
    %31 = vector.broadcast %30 : vector<1x128xf32> to vector<8x128xf32>
    %32 = arith.addf %29, %31 : vector<8x128xf32>
    %33 = arith.truncf %32 : vector<8x128xf32> to vector<8x128xbf16>
    %c2_23 = arith.constant 2 : index
    %c0_24 = arith.constant 0 : index
    %c0_25 = arith.constant 0 : index
    %34 = vector.load %arg4[%c2_23, %c0_24, %c0_25] : memref<3x128x128xbf16, #tpu.memory_space<vmem>>, vector<1x128x128xbf16>
    %35 = vector.shape_cast %34 : vector<1x128x128xbf16> to vector<128x128xbf16>
    %cst_26 = arith.constant dense<0.000000e+00> : vector<8x128xf32>
    %36 = tpu.matmul %33, %35, %cst_26 {dimension_numbers = #tpu.dot_dimension_numbers<[1], [0], [0], [1], [0, 0, 1, 1], [], []>} : vector<8x128xbf16>, vector<128x128xbf16>, vector<8x128xf32> -> vector<8x128xf32>
    %c3 = arith.constant 3 : index
    %c0_27 = arith.constant 0 : index
    %37 = vector.load %arg5[%c3, %c0_27] : memref<4x128xf32, #tpu.memory_space<vmem>>, vector<1x128xf32>
    %38 = vector.broadcast %37 : vector<1x128xf32> to vector<8x128xf32>
    %39 = arith.addf %36, %38 : vector<8x128xf32>
    %cst_28 = arith.constant dense<0xFF800000> : vector<8xf32>
    %40 = vector.multi_reduction <maximumf>, %39, %cst_28 [1] : vector<8x128xf32> to vector<8xf32>
    %41 = vector.shape_cast %40 : vector<8xf32> to vector<8x1xf32>
    %42 = vector.broadcast %41 : vector<8x1xf32> to vector<8x128xf32>
    %43 = arith.subf %39, %42 : vector<8x128xf32>
    %44 = math.exp %43 : vector<8x128xf32>
    %cst_29 = arith.constant dense<0.000000e+00> : vector<8xf32>
    %45 = vector.multi_reduction <add>, %44, %cst_29 [1] : vector<8x128xf32> to vector<8xf32>
    %46 = vector.shape_cast %45 : vector<8xf32> to vector<8x1xf32>
    %47 = tpu.reciprocal %46 {approx = true} : vector<8x1xf32> -> vector<8x1xf32>
    %48 = vector.broadcast %47 : vector<8x1xf32> to vector<8x128xf32>
    %49 = arith.mulf %44, %48 : vector<8x128xf32>
    %c0_30 = arith.constant 0 : index
    %c0_31 = arith.constant 0 : index
    %50 = vector.load %arg7[%c0_30, %c0_31] : memref<8x128xf32, #tpu.memory_space<vmem>>, vector<8x128xf32>
    tpu.vector_store %arg7[%c0_30, %c0_31], %49 {strides = array<i32>} : memref<8x128xf32, #tpu.memory_space<vmem>>, vector<8x128xf32>,
    return
  }
  func.func @transform_0(%arg0: i32) -> (i32, i32, i32) {
    %c0_i32 = arith.constant 0 : i32
    %c0_i32_0 = arith.constant 0 : i32
    %c0_i32_1 = arith.constant 0 : i32
    return %c0_i32, %arg0, %c0_i32_0 : i32, i32, i32
  }
  func.func @transform_1(%arg0: i32) -> (i32, i32) {
    %c0_i32 = arith.constant 0 : i32
    %c0_i32_0 = arith.constant 0 : i32
    %c0_i32_1 = arith.constant 0 : i32
    return %c0_i32, %c0_i32_0 : i32, i32
  }
  func.func @transform_2(%arg0: i32) -> (i32, i32) {
    %c0_i32 = arith.constant 0 : i32
    %c0_i32_0 = arith.constant 0 : i32
    %c0_i32_1 = arith.constant 0 : i32
    return %c0_i32, %c0_i32_0 : i32, i32
  }
  func.func @transform_3(%arg0: i32) -> (i32, i32, i32) {
    %c0_i32 = arith.constant 0 : i32
    %c0_i32_0 = arith.constant 0 : i32
    %c0_i32_1 = arith.constant 0 : i32
    %c0_i32_2 = arith.constant 0 : i32
    return %c0_i32, %c0_i32_0, %c0_i32_1 : i32, i32, i32
  }
  func.func @transform_4(%arg0: i32) -> (i32, i32) {
    %c0_i32 = arith.constant 0 : i32
    %c0_i32_0 = arith.constant 0 : i32
    %c0_i32_1 = arith.constant 0 : i32
    return %c0_i32, %c0_i32_0 : i32, i32
  }
  func.func @transform_5(%arg0: i32) -> (i32, i32) {
    %c0_i32 = arith.constant 0 : i32
    %c0_i32_0 = arith.constant 0 : i32
    return %arg0, %c0_i32 : i32, i32
  }
  func.func @transform_6(%arg0: i32) -> (i32, i32) {
    %c0_i32 = arith.constant 0 : i32
    %c0_i32_0 = arith.constant 0 : i32
    return %arg0, %c0_i32 : i32, i32
  }
}

</mosaic_0001>

<llo_original>
// kernel: tpu_custom_call.1
$region0: #{tpu_custom_call.1}
  #allocation0 [shape = 'u32[]', space=smem, size = 0x4, offset = 0x4, fixed_abs, tag = 'smem constant byte address 0x4 - core index']
  #allocation1 [shape = 'u32[144,128]{1,0:T(1,128)}', space=vmem, size = 0x12000, scoped, tag = 'internal scratch']
  %s0 = inlined_call_operand.hbm [shape: bf16[16,8,128], index: 0, kind: input, shape index: {}]
  %s1 = inlined_call_operand.hbm [shape: f32[16,128], index: 1, kind: input, shape index: {}]
  %s2 = inlined_call_operand.hbm [shape: bf16[128,128], index: 2, kind: input, shape index: {}]
  %s3 = inlined_call_operand.hbm [shape: bf16[3,128,128], index: 3, kind: input, shape index: {}]
  %s4 = inlined_call_operand.hbm [shape: f32[4,128], index: 4, kind: input, shape index: {}]
  %s5 = inlined_call_operand.hbm [shape: f32[8,128], index: 5, kind: output, shape index: {0}]
  %s6 = inlined_call_operand.hbm [shape: f32[8,128], index: 6, kind: output, shape index: {1}]
  %7 = xla_tuple %s5, %s6
  %s8 = sld [smem:[#allocation0]]
  $region58: #{tpu_custom_call.1} parent=0
    _
  %s10 = ssub.s32 1, %s8
  %s11 = scalar_select 0, %s10, %s8
  $region1: #{tpu_custom_call.1} parent=0
    #allocation2 [shape = 'u8[32768]{0}', space=vmem, size = 0x8000, scoped, tag = 'input window, operand 0, single buffered']
    #allocation3 [shape = 's32[1]{0}', space=sflag, size = 0x4, scoped, tag = 'scoped memory for tpu_custom_call.1']
    #allocation4 [shape = 's32[1]{0}', space=sflag, size = 0x4, scoped, tag = 'scoped memory for tpu_custom_call.1']
    #allocation5 [shape = 'u8[8192]{0}', space=vmem, size = 0x2000, scoped, tag = 'input window, operand 1, single buffered']
    #allocation6 [shape = 's32[1]{0}', space=sflag, size = 0x4, scoped, tag = 'scoped memory for tpu_custom_call.1']
    #allocation7 [shape = 'u8[32768]{0}', space=vmem, size = 0x8000, scoped, tag = 'input window, operand 2, single buffered']
    #allocation8 [shape = 'u8[98304]{0}', space=vmem, size = 0x18000, scoped, tag = 'input window, operand 3, single buffered']
    #allocation9 [shape = 's32[1]{0}', space=sflag, size = 0x4, scoped, tag = 'scoped memory for tpu_custom_call.1']
    #allocation10 [shape = 'u8[2048]{0}', space=vmem, size = 0x800, scoped, tag = 'input window, operand 4, single buffered']
    #allocation11 [shape = 'u8[4096]{0}', space=vmem, size = 0x1000, scoped, tag = 'output window, operand 0, single buffered']
    #allocation12 [shape = 'u8[4096]{0}', space=vmem, size = 0x1000, scoped, tag = 'output window, operand 1, single buffered']
    #allocation13 [shape = 's32[1]{0}', space=sflag, size = 0x4, scoped, tag = 'scoped memory for tpu_custom_call.1']
    %12 = vsyncpa [#allocation3], 0
    %13 = vsyncpa [#allocation6], 0
    %14 = vsyncpa [#allocation9], 0
    %15 = vsyncpa [#allocation4], 0
    %16 = vsyncpa [#allocation13], 0
    // Predicated region
    $region2: #{tpu_custom_call.1} parent=1 // pred_check
      _
    $region3: #{tpu_custom_call.1} parent=1 // pred_check_branch
      %18 = sbr.rel (0) target = $region5
    $region4: #{tpu_custom_call.1} parent=1 // pred_region
      %s20 = ssub.s32 1024, 1024
      %21 = vsyncadd [#allocation3], %s20
      %s22 = sshll.u32 [#allocation2], 4
      %s23 = int_to_ptr.vmem [resolvable:$true] %s22
      %28 = dma.hbm_to_vmem [thread:$0]  %s0, 1024, %s23, [#allocation3], 64, 64, 4
    $region5: #{tpu_custom_call.1} parent=1 // pred_fallthru
      _
    // Predicated region
    $region6: #{tpu_custom_call.1} parent=1 // pred_check
      _
    $region7: #{tpu_custom_call.1} parent=1 // pred_check_branch
      %30 = sbr.rel (0) target = $region9
    $region8: #{tpu_custom_call.1} parent=1 // pred_region
      %s32 = ssub.s32 256, 256
      %33 = vsyncadd [#allocation6], %s32
      %s34 = sshll.u32 [#allocation5], 4
      %s35 = int_to_ptr.vmem [resolvable:$true] %s34
      %40 = dma.hbm_to_vmem [thread:$0]  %s1, 256, %s35, [#allocation6], 128, 128, 8
    $region9: #{tpu_custom_call.1} parent=1 // pred_fallthru
      _
    // Predicated region
    $region10: #{tpu_custom_call.1} parent=1 // pred_check
      _
    $region11: #{tpu_custom_call.1} parent=1 // pred_check_branch
      %42 = sbr.rel (0) target = $region13
    $region12: #{tpu_custom_call.1} parent=1 // pred_region
      %s44 = ssub.s32 1024, 1024
      %45 = vsyncadd [#allocation6], %s44
      %s46 = sshll.u32 [#allocation7], 4
      %s47 = int_to_ptr.vmem [resolvable:$true] %s46
      %52 = dma.hbm_to_vmem [thread:$0]  %s2, 1024, %s47, [#allocation6], 64, 64, 4
    $region13: #{tpu_custom_call.1} parent=1 // pred_fallthru
      _
    // Predicated region
    $region14: #{tpu_custom_call.1} parent=1 // pred_check
      _
    $region15: #{tpu_custom_call.1} parent=1 // pred_check_branch
      %54 = sbr.rel (0) target = $region17
    $region16: #{tpu_custom_call.1} parent=1 // pred_region
      %s56 = ssub.s32 3072, 3072
      %57 = vsyncadd [#allocation9], %s56
      %s58 = sshll.u32 [#allocation8], 4
      %s59 = int_to_ptr.vmem [resolvable:$true] %s58
      %64 = dma.hbm_to_vmem [thread:$0]  %s3, 3072, %s59, [#allocation9], 64, 64, 4
    $region17: #{tpu_custom_call.1} parent=1 // pred_fallthru
      _
    // Predicated region
    $region18: #{tpu_custom_call.1} parent=1 // pred_check
      _
    $region19: #{tpu_custom_call.1} parent=1 // pred_check_branch
      %66 = sbr.rel (0) target = $region21
    $region20: #{tpu_custom_call.1} parent=1 // pred_region
      %s68 = ssub.s32 64, 64
      %69 = vsyncadd [#allocation9], %s68
      %s71 = sshll.u32 [#allocation10], 4
      %s72 = int_to_ptr.vmem [resolvable:$true] %s71
      %74 = dma.hbm_to_vmem [thread:$0]  %s4, 64, %s72, [#allocation9]
    $region21: #{tpu_custom_call.1} parent=1 // pred_fallthru
      _
    // Predicated region
    $region22: #{tpu_custom_call.1} parent=1 // pred_check
      _
    $region23: #{tpu_custom_call.1} parent=1 // pred_check_branch
      %76 = sbr.rel (0) target = $region25
    $region24: #{tpu_custom_call.1} parent=1 // pred_region
      %77 = dma.done [#allocation3], 1024
    $region25: #{tpu_custom_call.1} parent=1 // pred_fallthru
      _
    // Predicated region
    $region26: #{tpu_custom_call.1} parent=1 // pred_check
      _
    $region27: #{tpu_custom_call.1} parent=1 // pred_check_branch
      %79 = sbr.rel (0) target = $region29
    $region28: #{tpu_custom_call.1} parent=1 // pred_region
      %80 = dma.done [#allocation6], 256
    $region29: #{tpu_custom_call.1} parent=1 // pred_fallthru
      _
    // Predicated region
    $region30: #{tpu_custom_call.1} parent=1 // pred_check
      _
    $region31: #{tpu_custom_call.1} parent=1 // pred_check_branch
      %82 = sbr.rel (0) target = $region33
    $region32: #{tpu_custom_call.1} parent=1 // pred_region
      %83 = dma.done [#allocation6], 1024
    $region33: #{tpu_custom_call.1} parent=1 // pred_fallthru
      _
    // Predicated region
    $region34: #{tpu_custom_call.1} parent=1 // pred_check
      _
    $region35: #{tpu_custom_call.1} parent=1 // pred_check_branch
      %85 = sbr.rel (0) target = $region37
    $region36: #{tpu_custom_call.1} parent=1 // pred_region
      %86 = dma.done [#allocation9], 3072
    $region37: #{tpu_custom_call.1} parent=1 // pred_fallthru
      _
    // Predicated region
    $region38: #{tpu_custom_call.1} parent=1 // pred_check
      _
    $region39: #{tpu_custom_call.1} parent=1 // pred_check_branch
      %88 = sbr.rel (0) target = $region41
    $region40: #{tpu_custom_call.1} parent=1 // pred_region
      %89 = dma.done [#allocation9], 64
    $region41: #{tpu_custom_call.1} parent=1 // pred_fallthru
      _
    %v91 = vld [vmem:[#allocation2] sm:$0xf]
    %v92 = vld [vmem:[#allocation2 + $0x4] sm:$0xf]
    %v93 = vld [vmem:[#allocation2 + $0x8] sm:$0xf]
    %v94 = vld [vmem:[#allocation2 + $0xc] sm:$0xf]
    %v95 = vld [vmem:[#allocation2 + $0x10] sm:$0xf]
    %v96 = vld [vmem:[#allocation2 + $0x14] sm:$0xf]
    %v97 = vld [vmem:[#allocation2 + $0x18] sm:$0xf]
    %v98 = vld [vmem:[#allocation2 + $0x1c] sm:$0xf]
    %v99 = vld [vmem:[#allocation2 + $0x20] sm:$0xf]
    %v100 = vld [vmem:[#allocation2 + $0x24] sm:$0xf]
    %v101 = vld [vmem:[#allocation2 + $0x28] sm:$0xf]
    %v102 = vld [vmem:[#allocation2 + $0x2c] sm:$0xf]
    %v103 = vld [vmem:[#allocation2 + $0x30] sm:$0xf]
    %v104 = vld [vmem:[#allocation2 + $0x34] sm:$0xf]
    %v105 = vld [vmem:[#allocation2 + $0x38] sm:$0xf]
    %v106 = vld [vmem:[#allocation2 + $0x3c] sm:$0xf]
    %v107 = vld [vmem:[#allocation7] sm:$0xf]
    %v108 = vld [vmem:[#allocation7 + $0x4] sm:$0xf]
    %v109 = vld [vmem:[#allocation7 + $0x8] sm:$0xf]
    %v110 = vld [vmem:[#allocation7 + $0xc] sm:$0xf]
    %v111 = vld [vmem:[#allocation7 + $0x10] sm:$0xf]
    %v112 = vld [vmem:[#allocation7 + $0x14] sm:$0xf]
    %v113 = vld [vmem:[#allocation7 + $0x18] sm:$0xf]
    %v114 = vld [vmem:[#allocation7 + $0x1c] sm:$0xf]
    %v115 = vld [vmem:[#allocation7 + $0x20] sm:$0xf]
    %v116 = vld [vmem:[#allocation7 + $0x24] sm:$0xf]
    %v117 = vld [vmem:[#allocation7 + $0x28] sm:$0xf]
    %v118 = vld [vmem:[#allocation7 + $0x2c] sm:$0xf]
    %v119 = vld [vmem:[#allocation7 + $0x30] sm:$0xf]
    %v120 = vld [vmem:[#allocation7 + $0x34] sm:$0xf]
    %v121 = vld [vmem:[#allocation7 + $0x38] sm:$0xf]
    %v122 = vld [vmem:[#allocation7 + $0x3c] sm:$0xf]
    %v139 = vunpack.c.l.b16 %v91
    %v140 = vunpack.c.l.b16 %v92
    %v141 = vunpack.c.l.b16 %v93
    %v142 = vunpack.c.l.b16 %v94
    %v143 = vunpack.c.l.b16 %v95
    %v144 = vunpack.c.l.b16 %v96
    %v145 = vunpack.c.l.b16 %v97
    %v146 = vunpack.c.l.b16 %v98
    %v147 = vunpack.c.l.b16 %v99
    %v148 = vunpack.c.l.b16 %v100
    %v149 = vunpack.c.l.b16 %v101
    %v150 = vunpack.c.l.b16 %v102
    %v151 = vunpack.c.l.b16 %v103
    %v152 = vunpack.c.l.b16 %v104
    %v153 = vunpack.c.l.b16 %v105
    %v154 = vunpack.c.l.b16 %v106
    %v155 = vpack.c.b16 %v140, %v139
    %v156 = vpack.c.b16 %v142, %v141
    %v157 = vpack.c.b16 %v144, %v143
    %v158 = vpack.c.b16 %v146, %v145
    %v159 = vpack.c.b16 %v148, %v147
    %v160 = vpack.c.b16 %v150, %v149
    %v161 = vpack.c.b16 %v152, %v151
    %v162 = vpack.c.b16 %v154, %v153
    %v187 = vunpack.c.l.b16 %v107
    %v188 = vunpack.c.l.b16 %v108
    %v189 = vunpack.c.l.b16 %v109
    %v190 = vunpack.c.l.b16 %v110
    %v191 = vunpack.c.l.b16 %v111
    %v192 = vunpack.c.l.b16 %v112
    %v193 = vunpack.c.l.b16 %v113
    %v194 = vunpack.c.l.b16 %v114
    %v195 = vunpack.c.l.b16 %v115
    %v196 = vunpack.c.l.b16 %v116
    %v197 = vunpack.c.l.b16 %v117
    %v198 = vunpack.c.l.b16 %v118
    %v199 = vunpack.c.l.b16 %v119
    %v200 = vunpack.c.l.b16 %v120
    %v201 = vunpack.c.l.b16 %v121
    %v202 = vunpack.c.l.b16 %v122
    %v203 = vpack.c.b16 %v188, %v187
    %v204 = vpack.c.b16 %v190, %v189
    %v205 = vpack.c.b16 %v192, %v191
    %v206 = vpack.c.b16 %v194, %v193
    %v207 = vpack.c.b16 %v196, %v195
    %v208 = vpack.c.b16 %v198, %v197
    %v209 = vpack.c.b16 %v200, %v199
    %v210 = vpack.c.b16 %v202, %v201
    %219 = vmatprep.subr.bf16.mxu0 0
    %220 = vmatpush1.bf16.msra.mxu0 %v203
    %221 = vmatprep.subr.bf16.mxu0 0
    %222 = vmatpush1.bf16.msra.mxu0 %v204
    %223 = vmatprep.subr.bf16.mxu0 0
    %224 = vmatpush1.bf16.msra.mxu0 %v205
    %225 = vmatprep.subr.bf16.mxu0 0
    %226 = vmatpush1.bf16.msra.mxu0 %v206
    %227 = vmatprep.subr.bf16.mxu0 0
    %228 = vmatpush1.bf16.msra.mxu0 %v207
    %229 = vmatprep.subr.bf16.mxu0 0
    %230 = vmatpush1.bf16.msra.mxu0 %v208
    %231 = vmatprep.subr.bf16.mxu0 0
    %232 = vmatpush1.bf16.msra.mxu0 %v209
    %233 = vmatprep.subr.bf16.mxu0 0
    %234 = vmatpush1.bf16.msra.mxu0 %v210
    %235 = vmatprep.subr.bf16.mxu0 0
    %236 = vmatpush1.bf16.msra.mxu0 0
    %237 = vmatprep.subr.bf16.mxu0 0
    %238 = vmatpush1.bf16.msra.mxu0 0
    %239 = vmatprep.subr.bf16.mxu0 0
    %240 = vmatpush1.bf16.msra.mxu0 0
    %241 = vmatprep.subr.bf16.mxu0 0
    %242 = vmatpush1.bf16.msra.mxu0 0
    %243 = vmatprep.subr.bf16.mxu0 0
    %244 = vmatpush1.bf16.msra.mxu0 0
    %245 = vmatprep.subr.bf16.mxu0 0
    %246 = vmatpush1.bf16.msra.mxu0 0
    %247 = vmatprep.subr.bf16.mxu0 0
    %248 = vmatpush1.bf16.msra.mxu0 0
    %249 = vmatprep.subr.bf16.mxu0 0
    %250 = vmatpush1.bf16.msra.mxu0 0
    %251 = vmatprep.mubr.bf16.mxu0 0
    %252 = vmatmul.mubr.bf16.gmra.mrb[0].mxu0 %v155
    %v253 = vpop.f32.mrb[0].mxu0
    %v254 = vadd.f32 0.0, %v253
    %v255 = vpop.f32.mrb[0].mxu0
    %v256 = vpop.f32.mrb[0].mxu0
    %v257 = vadd.f32 0.0, %v256
    %v258 = vpop.f32.mrb[0].mxu0
    %259 = vmatprep.mubr.bf16.mxu0 0
    %260 = vmatmul.mubr.bf16.gmra.mrb[0].mxu0 %v156
    %v261 = vpop.f32.mrb[0].mxu0
    %v262 = vadd.f32 0.0, %v261
    %v263 = vpop.f32.mrb[0].mxu0
    %v264 = vpop.f32.mrb[0].mxu0
    %v265 = vadd.f32 0.0, %v264
    %v266 = vpop.f32.mrb[0].mxu0
    %267 = vmatprep.mubr.bf16.mxu0 0
    %268 = vmatmul.mubr.bf16.gmra.mrb[0].mxu0 %v157
    %v269 = vpop.f32.mrb[0].mxu0
    %v270 = vadd.f32 0.0, %v269
    %v271 = vpop.f32.mrb[0].mxu0
    %v272 = vpop.f32.mrb[0].mxu0
    %v273 = vadd.f32 0.0, %v272
    %v274 = vpop.f32.mrb[0].mxu0
    %275 = vmatprep.mubr.bf16.mxu0 0
    %276 = vmatmul.mubr.bf16.gmra.mrb[0].mxu0 %v158
    %v277 = vpop.f32.mrb[0].mxu0
    %v278 = vadd.f32 0.0, %v277
    %v279 = vpop.f32.mrb[0].mxu0
    %v280 = vpop.f32.mrb[0].mxu0
    %v281 = vadd.f32 0.0, %v280
    %v282 = vpop.f32.mrb[0].mxu0
    %283 = vmatprep.mubr.bf16.mxu0 0
    %284 = vmatmul.mubr.bf16.gmra.mrb[0].mxu0 %v159
    %v285 = vpop.f32.mrb[0].mxu0
    %v286 = vadd.f32 0.0, %v285
    %v287 = vpop.f32.mrb[0].mxu0
    %v288 = vpop.f32.mrb[0].mxu0
    %v289 = vadd.f32 0.0, %v288
    %v290 = vpop.f32.mrb[0].mxu0
    %291 = vmatprep.mubr.bf16.mxu0 0
    %292 = vmatmul.mubr.bf16.gmra.mrb[0].mxu0 %v160
    %v293 = vpop.f32.mrb[0].mxu0
    %v294 = vadd.f32 0.0, %v293
    %v295 = vpop.f32.mrb[0].mxu0
    %v296 = vpop.f32.mrb[0].mxu0
    %v297 = vadd.f32 0.0, %v296
    %v298 = vpop.f32.mrb[0].mxu0
    %299 = vmatprep.mubr.bf16.mxu0 0
    %300 = vmatmul.mubr.bf16.gmra.mrb[0].mxu0 %v161
    %v301 = vpop.f32.mrb[0].mxu0
    %v302 = vadd.f32 0.0, %v301
    %v303 = vpop.f32.mrb[0].mxu0
    %v304 = vpop.f32.mrb[0].mxu0
    %v305 = vadd.f32 0.0, %v304
    %v306 = vpop.f32.mrb[0].mxu0
    %307 = vmatprep.mubr.bf16.mxu0 0
    %308 = vmatmul.mubr.bf16.gmra.mrb[0].mxu0 %v162
    %v309 = vpop.f32.mrb[0].mxu0
    %v310 = vadd.f32 0.0, %v309
    %v311 = vpop.f32.mrb[0].mxu0
    %v312 = vpop.f32.mrb[0].mxu0
    %v313 = vadd.f32 0.0, %v312
    %v314 = vpop.f32.mrb[0].mxu0
    %315 = vdwg.mxu0
    %v316 = vld [vmem:[#allocation10] sm:$0x1]
    %v317 = vlaneseq
    %v318 = vshrl.u32 %v317, 7
    %v319 = vsub.s32 0, %v318
    %v320 = vrot.slane %v316, %v319
    %v321 = vadd.f32 %v254, %v320
    %v322 = vadd.f32 %v257, %v320
    %v323 = vadd.f32 %v262, %v320
    %v324 = vadd.f32 %v265, %v320
    %v325 = vadd.f32 %v270, %v320
    %v326 = vadd.f32 %v273, %v320
    %v327 = vadd.f32 %v278, %v320
    %v328 = vadd.f32 %v281, %v320
    %v329 = vadd.f32 %v286, %v320
    %v330 = vadd.f32 %v289, %v320
    %v331 = vadd.f32 %v294, %v320
    %v332 = vadd.f32 %v297, %v320
    %v333 = vadd.f32 %v302, %v320
    %v334 = vadd.f32 %v305, %v320
    %v335 = vadd.f32 %v310, %v320
    %v336 = vadd.f32 %v313, %v320
    %v337 = vmax.f32 %v321, 0.0
    %v338 = vmax.f32 %v322, 0.0
    %v339 = vmax.f32 %v323, 0.0
    %v340 = vmax.f32 %v324, 0.0
    %v341 = vmax.f32 %v325, 0.0
    %v342 = vmax.f32 %v326, 0.0
    %v343 = vmax.f32 %v327, 0.0
    %v344 = vmax.f32 %v328, 0.0
    %v345 = vmax.f32 %v329, 0.0
    %v346 = vmax.f32 %v330, 0.0
    %v347 = vmax.f32 %v331, 0.0
    %v348 = vmax.f32 %v332, 0.0
    %v349 = vmax.f32 %v333, 0.0
    %v350 = vmax.f32 %v334, 0.0
    %v351 = vmax.f32 %v335, 0.0
    %v352 = vmax.f32 %v336, 0.0
    %v353 = vld [vmem:[#allocation5] sm:$0xff]
    %v354 = vld [vmem:[#allocation5 + $0x8] sm:$0xff]
    %v357 = vcombine.high %v353, %v353
    %v359 = vunpack.c.l.s4 1966171168
    %v360 = vunpack.c.0.s8 %v359
    %v361 = vlaneseq
    %v362 = vshrl.u32 %v361, 7
    %v363 = vsub.s32 %v360, %v362
    %v364 = vrot.slane %v353, %v363
    %v366 = vunpack.c.l.s4 1966171168
    %v367 = vunpack.c.0.s8 %v366
    %v368 = vlaneseq
    %v369 = vshrl.u32 %v368, 7
    %v370 = vsub.s32 %v367, %v369
    %v371 = vrot.slane %v357, %v370
    %v372 = vcombine.high %v364, %v364
    %v373 = vcombine.high %v371, %v371
    %v375 = vunpack.c.l.s4 1966171168
    %v376 = vunpack.c.0.s8 %v375
    %v377 = vlaneseq
    %v378 = vshrl.u32 %v377, 7
    %v379 = vsub.s32 %v376, %v378
    %v380 = vrot.slane %v364, %v379
    %v382 = vunpack.c.l.s4 1966171168
    %v383 = vunpack.c.0.s8 %v382
    %v384 = vlaneseq
    %v385 = vshrl.u32 %v384, 7
    %v386 = vsub.s32 %v383, %v385
    %v387 = vrot.slane %v371, %v386
    %v389 = vunpack.c.l.s4 1966171168
    %v390 = vunpack.c.0.s8 %v389
    %v391 = vlaneseq
    %v392 = vshrl.u32 %v391, 7
    %v393 = vsub.s32 %v390, %v392
    %v394 = vrot.slane %v372, %v393
    %v396 = vunpack.c.l.s4 1966171168
    %v397 = vunpack.c.0.s8 %v396
    %v398 = vlaneseq
    %v399 = vshrl.u32 %v398, 7
    %v400 = vsub.s32 %v397, %v399
    %v401 = vrot.slane %v373, %v400
    %v402 = vcombine.high %v380, %v380
    %v403 = vcombine.high %v387, %v387
    %v404 = vcombine.high %v394, %v394
    %v405 = vcombine.high %v401, %v401
    %v406 = vcombine.high %v354, %v354
    %v408 = vunpack.c.l.s4 1966171168
    %v409 = vunpack.c.0.s8 %v408
    %v410 = vlaneseq
    %v411 = vshrl.u32 %v410, 7
    %v412 = vsub.s32 %v409, %v411
    %v413 = vrot.slane %v354, %v412
    %v415 = vunpack.c.l.s4 1966171168
    %v416 = vunpack.c.0.s8 %v415
    %v417 = vlaneseq
    %v418 = vshrl.u32 %v417, 7
    %v419 = vsub.s32 %v416, %v418
    %v420 = vrot.slane %v406, %v419
    %v421 = vcombine.high %v413, %v413
    %v422 = vcombine.high %v420, %v420
    %v424 = vunpack.c.l.s4 1966171168
    %v425 = vunpack.c.0.s8 %v424
    %v426 = vlaneseq
    %v427 = vshrl.u32 %v426, 7
    %v428 = vsub.s32 %v425, %v427
    %v429 = vrot.slane %v413, %v428
    %v431 = vunpack.c.l.s4 1966171168
    %v432 = vunpack.c.0.s8 %v431
    %v433 = vlaneseq
    %v434 = vshrl.u32 %v433, 7
    %v435 = vsub.s32 %v432, %v434
    %v436 = vrot.slane %v420, %v435
    %v438 = vunpack.c.l.s4 1966171168
    %v439 = vunpack.c.0.s8 %v438
    %v440 = vlaneseq
    %v441 = vshrl.u32 %v440, 7
    %v442 = vsub.s32 %v439, %v441
    %v443 = vrot.slane %v421, %v442
    %v445 = vunpack.c.l.s4 1966171168
    %v446 = vunpack.c.0.s8 %v445
    %v447 = vlaneseq
    %v448 = vshrl.u32 %v447, 7
    %v449 = vsub.s32 %v446, %v448
    %v450 = vrot.slane %v422, %v449
    %v451 = vcombine.high %v429, %v429
    %v452 = vcombine.high %v436, %v436
    %v453 = vcombine.high %v443, %v443
    %v454 = vcombine.high %v450, %v450
    %v455 = vlaneseq
    %v456 = vshrl.u32 %v455, 7
    %v457 = vsub.s32 0, %v456
    %v458 = vrot.slane %v380, %v457
    %v459 = vlaneseq
    %v460 = vshrl.u32 %v459, 7
    %v461 = vsub.s32 0, %v460
    %v462 = vrot.slane %v394, %v461
    %v463 = vlaneseq
    %v464 = vshrl.u32 %v463, 7
    %v465 = vsub.s32 0, %v464
    %v466 = vrot.slane %v402, %v465
    %v467 = vlaneseq
    %v468 = vshrl.u32 %v467, 7
    %v469 = vsub.s32 0, %v468
    %v470 = vrot.slane %v404, %v469
    %v471 = vlaneseq
    %v472 = vshrl.u32 %v471, 7
    %v473 = vsub.s32 0, %v472
    %v474 = vrot.slane %v387, %v473
    %v475 = vlaneseq
    %v476 = vshrl.u32 %v475, 7
    %v477 = vsub.s32 0, %v476
    %v478 = vrot.slane %v401, %v477
    %v479 = vlaneseq
    %v480 = vshrl.u32 %v479, 7
    %v481 = vsub.s32 0, %v480
    %v482 = vrot.slane %v403, %v481
    %v483 = vlaneseq
    %v484 = vshrl.u32 %v483, 7
    %v485 = vsub.s32 0, %v484
    %v486 = vrot.slane %v405, %v485
    %v487 = vlaneseq
    %v488 = vshrl.u32 %v487, 7
    %v489 = vsub.s32 0, %v488
    %v490 = vrot.slane %v429, %v489
    %v491 = vlaneseq
    %v492 = vshrl.u32 %v491, 7
    %v493 = vsub.s32 0, %v492
    %v494 = vrot.slane %v443, %v493
    %v495 = vlaneseq
    %v496 = vshrl.u32 %v495, 7
    %v497 = vsub.s32 0, %v496
    %v498 = vrot.slane %v451, %v497
    %v499 = vlaneseq
    %v500 = vshrl.u32 %v499, 7
    %v501 = vsub.s32 0, %v500
    %v502 = vrot.slane %v453, %v501
    %v503 = vlaneseq
    %v504 = vshrl.u32 %v503, 7
    %v505 = vsub.s32 0, %v504
    %v506 = vrot.slane %v436, %v505
    %v507 = vlaneseq
    %v508 = vshrl.u32 %v507, 7
    %v509 = vsub.s32 0, %v508
    %v510 = vrot.slane %v450, %v509
    %v511 = vlaneseq
    %v512 = vshrl.u32 %v511, 7
    %v513 = vsub.s32 0, %v512
    %v514 = vrot.slane %v452, %v513
    %v515 = vlaneseq
    %v516 = vshrl.u32 %v515, 7
    %v517 = vsub.s32 0, %v516
    %v518 = vrot.slane %v454, %v517
    %v535 = vmul.f32 %v337, %v458
    %v536 = vmul.f32 %v338, %v462
    %v537 = vmul.f32 %v339, %v466
    %v538 = vmul.f32 %v340, %v470
    %v539 = vmul.f32 %v341, %v474
    %v540 = vmul.f32 %v342, %v478
    %v541 = vmul.f32 %v343, %v482
    %v542 = vmul.f32 %v344, %v486
    %v543 = vmul.f32 %v345, %v490
    %v544 = vmul.f32 %v346, %v494
    %v545 = vmul.f32 %v347, %v498
    %v546 = vmul.f32 %v348, %v502
    %v547 = vmul.f32 %v349, %v506
    %v548 = vmul.f32 %v350, %v510
    %v549 = vmul.f32 %v351, %v514
    %v550 = vmul.f32 %v352, %v518
    %v551 = vmax.f32 %v535, %v539
    %v552 = vmax.f32 %v536, %v540
    %v553 = vmax.f32 %v537, %v541
    %v554 = vmax.f32 %v538, %v542
    %v555 = vmax.f32 %v551, %v543
    %v556 = vmax.f32 %v552, %v544
    %v557 = vmax.f32 %v553, %v545
    %v558 = vmax.f32 %v554, %v546
    %v559 = vmax.f32 %v555, %v547
    %v560 = vmax.f32 %v556, %v548
    %v561 = vmax.f32 %v557, %v549
    %v562 = vmax.f32 %v558, %v550
    %v563 = vmax.f32 %v559, %v560
    %v564 = vmax.f32 %v561, %v562
    %v565 = vmax.f32 %v563, %v564
    %v566 = vpack.c.bf16 %v565, %v565
    %v567 = vld [vmem:[#allocation8] sm:$0xf]
    %v568 = vld [vmem:[#allocation8 + $0x4] sm:$0xf]
    %v569 = vld [vmem:[#allocation8 + $0x8] sm:$0xf]
    %v570 = vld [vmem:[#allocation8 + $0xc] sm:$0xf]
    %v571 = vld [vmem:[#allocation8 + $0x10] sm:$0xf]
    %v572 = vld [vmem:[#allocation8 + $0x14] sm:$0xf]
    %v573 = vld [vmem:[#allocation8 + $0x18] sm:$0xf]
    %v574 = vld [vmem:[#allocation8 + $0x1c] sm:$0xf]
    %v575 = vld [vmem:[#allocation8 + $0x20] sm:$0xf]
    %v576 = vld [vmem:[#allocation8 + $0x24] sm:$0xf]
    %v577 = vld [vmem:[#allocation8 + $0x28] sm:$0xf]
    %v578 = vld [vmem:[#allocation8 + $0x2c] sm:$0xf]
    %v579 = vld [vmem:[#allocation8 + $0x30] sm:$0xf]
    %v580 = vld [vmem:[#allocation8 + $0x34] sm:$0xf]
    %v581 = vld [vmem:[#allocation8 + $0x38] sm:$0xf]
    %v582 = vld [vmem:[#allocation8 + $0x3c] sm:$0xf]
    %v583 = vld [vmem:[#allocation10 + $0x1] sm:$0x1]
    %v584 = vlaneseq
    %v585 = vshrl.u32 %v584, 7
    %v586 = vsub.s32 0, %v585
    %v587 = vrot.slane %v583, %v586
    %v604 = vunpack.c.l.b16 %v567
    %v605 = vunpack.c.l.b16 %v568
    %v606 = vunpack.c.l.b16 %v569
    %v607 = vunpack.c.l.b16 %v570
    %v608 = vunpack.c.l.b16 %v571
    %v609 = vunpack.c.l.b16 %v572
    %v610 = vunpack.c.l.b16 %v573
    %v611 = vunpack.c.l.b16 %v574
    %v612 = vunpack.c.l.b16 %v575
    %v613 = vunpack.c.l.b16 %v576
    %v614 = vunpack.c.l.b16 %v577
    %v615 = vunpack.c.l.b16 %v578
    %v616 = vunpack.c.l.b16 %v579
    %v617 = vunpack.c.l.b16 %v580
    %v618 = vunpack.c.l.b16 %v581
    %v619 = vunpack.c.l.b16 %v582
    %v620 = vpack.c.b16 %v605, %v604
    %v621 = vpack.c.b16 %v607, %v606
    %v622 = vpack.c.b16 %v609, %v608
    %v623 = vpack.c.b16 %v611, %v610
    %v624 = vpack.c.b16 %v613, %v612
    %v625 = vpack.c.b16 %v615, %v614
    %v626 = vpack.c.b16 %v617, %v616
    %v627 = vpack.c.b16 %v619, %v618
    %636 = vmatprep.subr.bf16.mxu0 0
    %637 = vmatpush1.bf16.msra.mxu0 %v620
    %638 = vmatprep.subr.bf16.mxu0 0
    %639 = vmatpush1.bf16.msra.mxu0 %v621
    %640 = vmatprep.subr.bf16.mxu0 0
    %641 = vmatpush1.bf16.msra.mxu0 %v622
    %642 = vmatprep.subr.bf16.mxu0 0
    %643 = vmatpush1.bf16.msra.mxu0 %v623
    %644 = vmatprep.subr.bf16.mxu0 0
    %645 = vmatpush1.bf16.msra.mxu0 %v624
    %646 = vmatprep.subr.bf16.mxu0 0
    %647 = vmatpush1.bf16.msra.mxu0 %v625
    %648 = vmatprep.subr.bf16.mxu0 0
    %649 = vmatpush1.bf16.msra.mxu0 %v626
    %650 = vmatprep.subr.bf16.mxu0 0
    %651 = vmatpush1.bf16.msra.mxu0 %v627
    %652 = vmatprep.subr.bf16.mxu0 0
    %653 = vmatpush1.bf16.msra.mxu0 0
    %654 = vmatprep.subr.bf16.mxu0 0
    %655 = vmatpush1.bf16.msra.mxu0 0
    %656 = vmatprep.subr.bf16.mxu0 0
    %657 = vmatpush1.bf16.msra.mxu0 0
    %658 = vmatprep.subr.bf16.mxu0 0
    %659 = vmatpush1.bf16.msra.mxu0 0
    %660 = vmatprep.subr.bf16.mxu0 0
    %661 = vmatpush1.bf16.msra.mxu0 0
    %662 = vmatprep.subr.bf16.mxu0 0
    %663 = vmatpush1.bf16.msra.mxu0 0
    %664 = vmatprep.subr.bf16.mxu0 0
    %665 = vmatpush1.bf16.msra.mxu0 0
    %666 = vmatprep.subr.bf16.mxu0 0
    %667 = vmatpush1.bf16.msra.mxu0 0
    %668 = vmatprep.mubr.bf16.mxu0 0
    %669 = vmatmul.mubr.bf16.gmra.mrb[0].mxu0 %v566
    %v670 = vpop.f32.mrb[0].mxu0
    %v671 = vadd.f32 %v587, %v670
    %v672 = vpop.f32.mrb[0].mxu0
    %v673 = vpop.f32.mrb[0].mxu0
    %v674 = vpop.f32.mrb[0].mxu0
    %675 = vdwg.mxu0
    %v676 = vmax.f32 %v671, 0.0
    %677 = vst [vmem:[#allocation11] sm:$0xff] %v676
    %v678 = vpack.c.bf16 %v676, %v676
    %s679 = scalar_lea.vmem [#allocation8], 64
    %v680 = vld [vmem:[%s679] sm:$0xf]
    %v681 = vld [vmem:[%s679 + $0x4] sm:$0xf]
    %v682 = vld [vmem:[%s679 + $0x8] sm:$0xf]
    %v683 = vld [vmem:[%s679 + $0xc] sm:$0xf]
    %v684 = vld [vmem:[%s679 + $0x10] sm:$0xf]
    %v685 = vld [vmem:[%s679 + $0x14] sm:$0xf]
    %v686 = vld [vmem:[%s679 + $0x18] sm:$0xf]
    %v687 = vld [vmem:[%s679 + $0x1c] sm:$0xf]
    %v688 = vld [vmem:[%s679 + $0x20] sm:$0xf]
    %v689 = vld [vmem:[%s679 + $0x24] sm:$0xf]
    %v690 = vld [vmem:[%s679 + $0x28] sm:$0xf]
    %v691 = vld [vmem:[%s679 + $0x2c] sm:$0xf]
    %v692 = vld [vmem:[%s679 + $0x30] sm:$0xf]
    %v693 = vld [vmem:[%s679 + $0x34] sm:$0xf]
    %v694 = vld [vmem:[%s679 + $0x38] sm:$0xf]
    %v695 = vld [vmem:[%s679 + $0x3c] sm:$0xf]
    %v696 = vld [vmem:[#allocation10 + $0x2] sm:$0x1]
    %v697 = vlaneseq
    %v698 = vshrl.u32 %v697, 7
    %v699 = vsub.s32 0, %v698
    %v700 = vrot.slane %v696, %v699
    %v717 = vunpack.c.l.b16 %v680
    %v718 = vunpack.c.l.b16 %v681
    %v719 = vunpack.c.l.b16 %v682
    %v720 = vunpack.c.l.b16 %v683
    %v721 = vunpack.c.l.b16 %v684
    %v722 = vunpack.c.l.b16 %v685
    %v723 = vunpack.c.l.b16 %v686
    %v724 = vunpack.c.l.b16 %v687
    %v725 = vunpack.c.l.b16 %v688
    %v726 = vunpack.c.l.b16 %v689
    %v727 = vunpack.c.l.b16 %v690
    %v728 = vunpack.c.l.b16 %v691
    %v729 = vunpack.c.l.b16 %v692
    %v730 = vunpack.c.l.b16 %v693
    %v731 = vunpack.c.l.b16 %v694
    %v732 = vunpack.c.l.b16 %v695
    %v733 = vpack.c.b16 %v718, %v717
    %v734 = vpack.c.b16 %v720, %v719
    %v735 = vpack.c.b16 %v722, %v721
    %v736 = vpack.c.b16 %v724, %v723
    %v737 = vpack.c.b16 %v726, %v725
    %v738 = vpack.c.b16 %v728, %v727
    %v739 = vpack.c.b16 %v730, %v729
    %v740 = vpack.c.b16 %v732, %v731
    %749 = vmatprep.subr.bf16.mxu0 0
    %750 = vmatpush1.bf16.msra.mxu0 %v733
    %751 = vmatprep.subr.bf16.mxu0 0
    %752 = vmatpush1.bf16.msra.mxu0 %v734
    %753 = vmatprep.subr.bf16.mxu0 0
    %754 = vmatpush1.bf16.msra.mxu0 %v735
    %755 = vmatprep.subr.bf16.mxu0 0
    %756 = vmatpush1.bf16.msra.mxu0 %v736
    %757 = vmatprep.subr.bf16.mxu0 0
    %758 = vmatpush1.bf16.msra.mxu0 %v737
    %759 = vmatprep.subr.bf16.mxu0 0
    %760 = vmatpush1.bf16.msra.mxu0 %v738
    %761 = vmatprep.subr.bf16.mxu0 0
    %762 = vmatpush1.bf16.msra.mxu0 %v739
    %763 = vmatprep.subr.bf16.mxu0 0
    %764 = vmatpush1.bf16.msra.mxu0 %v740
    %765 = vmatprep.subr.bf16.mxu0 0
    %766 = vmatpush1.bf16.msra.mxu0 0
    %767 = vmatprep.subr.bf16.mxu0 0
    %768 = vmatpush1.bf16.msra.mxu0 0
    %769 = vmatprep.subr.bf16.mxu0 0
    %770 = vmatpush1.bf16.msra.mxu0 0
    %771 = vmatprep.subr.bf16.mxu0 0
    %772 = vmatpush1.bf16.msra.mxu0 0
    %773 = vmatprep.subr.bf16.mxu0 0
    %774 = vmatpush1.bf16.msra.mxu0 0
    %775 = vmatprep.subr.bf16.mxu0 0
    %776 = vmatpush1.bf16.msra.mxu0 0
    %777 = vmatprep.subr.bf16.mxu0 0
    %778 = vmatpush1.bf16.msra.mxu0 0
    %779 = vmatprep.subr.bf16.mxu0 0
    %780 = vmatpush1.bf16.msra.mxu0 0
    %781 = vmatprep.mubr.bf16.mxu0 0
    %782 = vmatmul.mubr.bf16.gmra.mrb[0].mxu0 %v678
    %v783 = vpop.f32.mrb[0].mxu0
    %v784 = vadd.f32 %v700, %v783
    %v785 = vpop.f32.mrb[0].mxu0
    %v786 = vpop.f32.mrb[0].mxu0
    %v787 = vpop.f32.mrb[0].mxu0
    %788 = vdwg.mxu0
    %v789 = vpack.c.bf16 %v784, %v784
    %s790 = scalar_lea.vmem [#allocation8], 128
    %v791 = vld [vmem:[%s790] sm:$0xf]
    %v792 = vld [vmem:[%s790 + $0x4] sm:$0xf]
    %v793 = vld [vmem:[%s790 + $0x8] sm:$0xf]
    %v794 = vld [vmem:[%s790 + $0xc] sm:$0xf]
    %v795 = vld [vmem:[%s790 + $0x10] sm:$0xf]
    %v796 = vld [vmem:[%s790 + $0x14] sm:$0xf]
    %v797 = vld [vmem:[%s790 + $0x18] sm:$0xf]
    %v798 = vld [vmem:[%s790 + $0x1c] sm:$0xf]
    %v799 = vld [vmem:[%s790 + $0x20] sm:$0xf]
    %v800 = vld [vmem:[%s790 + $0x24] sm:$0xf]
    %v801 = vld [vmem:[%s790 + $0x28] sm:$0xf]
    %v802 = vld [vmem:[%s790 + $0x2c] sm:$0xf]
    %v803 = vld [vmem:[%s790 + $0x30] sm:$0xf]
    %v804 = vld [vmem:[%s790 + $0x34] sm:$0xf]
    %v805 = vld [vmem:[%s790 + $0x38] sm:$0xf]
    %v806 = vld [vmem:[%s790 + $0x3c] sm:$0xf]
    %v807 = vld [vmem:[#allocation10 + $0x3] sm:$0x1]
    %v808 = vlaneseq
    %v809 = vshrl.u32 %v808, 7
    %v810 = vsub.s32 0, %v809
    %v811 = vrot.slane %v807, %v810
    %v828 = vunpack.c.l.b16 %v791
    %v829 = vunpack.c.l.b16 %v792
    %v830 = vunpack.c.l.b16 %v793
    %v831 = vunpack.c.l.b16 %v794
    %v832 = vunpack.c.l.b16 %v795
    %v833 = vunpack.c.l.b16 %v796
    %v834 = vunpack.c.l.b16 %v797
    %v835 = vunpack.c.l.b16 %v798
    %v836 = vunpack.c.l.b16 %v799
    %v837 = vunpack.c.l.b16 %v800
    %v838 = vunpack.c.l.b16 %v801
    %v839 = vunpack.c.l.b16 %v802
    %v840 = vunpack.c.l.b16 %v803
    %v841 = vunpack.c.l.b16 %v804
    %v842 = vunpack.c.l.b16 %v805
    %v843 = vunpack.c.l.b16 %v806
    %v844 = vpack.c.b16 %v829, %v828
    %v845 = vpack.c.b16 %v831, %v830
    %v846 = vpack.c.b16 %v833, %v832
    %v847 = vpack.c.b16 %v835, %v834
    %v848 = vpack.c.b16 %v837, %v836
    %v849 = vpack.c.b16 %v839, %v838
    %v850 = vpack.c.b16 %v841, %v840
    %v851 = vpack.c.b16 %v843, %v842
    %860 = vmatprep.subr.bf16.mxu0 0
    %861 = vmatpush1.bf16.msra.mxu0 %v844
    %862 = vmatprep.subr.bf16.mxu0 0
    %863 = vmatpush1.bf16.msra.mxu0 %v845
    %864 = vmatprep.subr.bf16.mxu0 0
    %865 = vmatpush1.bf16.msra.mxu0 %v846
    %866 = vmatprep.subr.bf16.mxu0 0
    %867 = vmatpush1.bf16.msra.mxu0 %v847
    %868 = vmatprep.subr.bf16.mxu0 0
    %869 = vmatpush1.bf16.msra.mxu0 %v848
    %870 = vmatprep.subr.bf16.mxu0 0
    %871 = vmatpush1.bf16.msra.mxu0 %v849
    %872 = vmatprep.subr.bf16.mxu0 0
    %873 = vmatpush1.bf16.msra.mxu0 %v850
    %874 = vmatprep.subr.bf16.mxu0 0
    %875 = vmatpush1.bf16.msra.mxu0 %v851
    %876 = vmatprep.subr.bf16.mxu0 0
    %877 = vmatpush1.bf16.msra.mxu0 0
    %878 = vmatprep.subr.bf16.mxu0 0
    %879 = vmatpush1.bf16.msra.mxu0 0
    %880 = vmatprep.subr.bf16.mxu0 0
    %881 = vmatpush1.bf16.msra.mxu0 0
    %882 = vmatprep.subr.bf16.mxu0 0
    %883 = vmatpush1.bf16.msra.mxu0 0
    %884 = vmatprep.subr.bf16.mxu0 0
    %885 = vmatpush1.bf16.msra.mxu0 0
    %886 = vmatprep.subr.bf16.mxu0 0
    %887 = vmatpush1.bf16.msra.mxu0 0
    %888 = vmatprep.subr.bf16.mxu0 0
    %889 = vmatpush1.bf16.msra.mxu0 0
    %890 = vmatprep.subr.bf16.mxu0 0
    %891 = vmatpush1.bf16.msra.mxu0 0
    %892 = vmatprep.mubr.bf16.mxu0 0
    %893 = vmatmul.mubr.bf16.gmra.mrb[0].mxu0 %v789
    %v894 = vpop.f32.mrb[0].mxu0
    %v895 = vadd.f32 %v811, %v894
    %v896 = vpop.f32.mrb[0].mxu0
    %v897 = vpop.f32.mrb[0].mxu0
    %v898 = vpop.f32.mrb[0].mxu0
    %899 = vdwg.mxu0
    %900 = vmax.xlane.f32.xlu0 %v895
    %v901 = vpop.xlane.xlu0 %900
    %v902 = vsub.f32 %v895, %v901
    %v903 = vmul.f32 %v902, 1.442695
    %v904 = vpow.pop %v903
    %905 = vadd.xlane.f32.xlu0 %v904
    %v906 = vpop.xlane.xlu0 %905
    %v907 = vrcp.pop %v906
    %v908 = vmul.f32 %v904, %v907
    %909 = vst [vmem:[#allocation12] sm:$0xff] %v908
    // Predicated region
    $region42: #{tpu_custom_call.1} parent=1 // pred_check
      _
    $region43: #{tpu_custom_call.1} parent=1 // pred_check_branch
      %911 = sbr.rel (0) target = $region45
    $region44: #{tpu_custom_call.1} parent=1 // pred_region
      %s913 = ssub.s32 128, 128
      %914 = vsyncadd [#allocation4], %s913
      %s916 = sshll.u32 [#allocation11], 4
      %s917 = int_to_ptr.vmem [resolvable:$true] %s916
      %919 = dma.vmem_to_hbm [thread:$0]  %s917, 128, %s5, [#allocation4]
    $region45: #{tpu_custom_call.1} parent=1 // pred_fallthru
      _
    // Predicated region
    $region46: #{tpu_custom_call.1} parent=1 // pred_check
      _
    $region47: #{tpu_custom_call.1} parent=1 // pred_check_branch
      %921 = sbr.rel (0) target = $region49
    $region48: #{tpu_custom_call.1} parent=1 // pred_region
      %s923 = ssub.s32 128, 128
      %924 = vsyncadd [#allocation13], %s923
      %s926 = sshll.u32 [#allocation12], 4
      %s927 = int_to_ptr.vmem [resolvable:$true] %s926
      %929 = dma.vmem_to_hbm [thread:$0]  %s927, 128, %s6, [#allocation13]
    $region49: #{tpu_custom_call.1} parent=1 // pred_fallthru
      _
    // Predicated region
    $region50: #{tpu_custom_call.1} parent=1 // pred_check
      _
    $region51: #{tpu_custom_call.1} parent=1 // pred_check_branch
      %931 = sbr.rel (0) target = $region53
    $region52: #{tpu_custom_call.1} parent=1 // pred_region
      %932 = dma.done [#allocation4], 128
    $region53: #{tpu_custom_call.1} parent=1 // pred_fallthru
      _
    // Predicated region
    $region54: #{tpu_custom_call.1} parent=1 // pred_check
      _
    $region55: #{tpu_custom_call.1} parent=1 // pred_check_branch
      %934 = sbr.rel (0) target = $region57
    $region56: #{tpu_custom_call.1} parent=1 // pred_region
      %935 = dma.done [#allocation13], 128
    $region57: #{tpu_custom_call.1} parent=1 // pred_fallthru
      _
    %936 = vsyncpa [#allocation3], 1
    %937 = vsyncpa [#allocation6], 1
    %938 = vsyncpa [#allocation9], 1
    %939 = vsyncpa [#allocation4], 1
    %940 = vsyncpa [#allocation13], 1

</llo_original>
